<compile_context>
chip_gen: v7x
topology: tpu7x:2x2x1
jax: 0.10.0
libtpu: 0.0.40
codegen_flags: <defaults>
</compile_context>

<pallas_src>
import functools

import jax
import jax.numpy as jnp
from jax.experimental import pallas as pl
from jax.experimental.pallas import tpu as pltpu

_LANE = 128          # lane (last-dim) tiling quantum
_SUBLANE_BF16 = 16   # bf16 sublane pack (second-to-last dim quantum)


def _round_up(x, m):
    return (x + m - 1) // m * m


# ----------------------------------------------------------------------------
# Pallas kernels
# ----------------------------------------------------------------------------
def _svi_affine_kernel_direct(x_ref, w_ref, o_ref, *, relu):
    # x: (tn, tk) bf16, w: (tk, tc) bf16, o: (tn, tc) f32.  Single K block.
    y = jnp.dot(x_ref[...], w_ref[...], preferred_element_type=jnp.float32)
    if relu:
        y = jnp.maximum(y, 0.0)
    o_ref[...] = y.astype(o_ref.dtype)


def _svi_affine_kernel_acc(x_ref, w_ref, o_ref, acc_ref, *, relu):
    # K-tiled variant: accumulate partial products in an f32 VMEM scratch.
    @pl.when(pl.program_id(2) == 0)
    def _init():
        acc_ref[...] = jnp.zeros_like(acc_ref)

    acc_ref[...] += jnp.dot(x_ref[...], w_ref[...],
                            preferred_element_type=jnp.float32)

    @pl.when(pl.program_id(2) == pl.num_programs(2) - 1)
    def _finalize():
        y = acc_ref[...]
        if relu:
            y = jnp.maximum(y, 0.0)
        o_ref[...] = y.astype(o_ref.dtype)


# ----------------------------------------------------------------------------
# Parameter setup / variational weight sampling (plain-JAX glue).
# ----------------------------------------------------------------------------
def init_fac_aff_params(key, shape):
    """shape = (in_features, out_features); He init for mu, rho = -4.

    Parameters are stored pre-transposed as (in_features, out_features) so the
    sampled weights come out directly in the kernel's (IF, S, OF) layout.
    """
    in_f, out_f = shape
    he_std = (2.0 / in_f) ** 0.5
    mu = he_std * jax.random.normal(key, (in_f, out_f), jnp.float32)
    rho = jnp.full((in_f, out_f), -4.0, jnp.float32)
    return {"mu": mu, "rho": rho}


def sample_radial_weights(key, params, vi_sample_n):
    """Radial posterior: w = mu + softplus(rho) * (eps/||eps||) * r.

    Emitted directly as (IF, S, OF) so the lane-dense (IF, S*OF) slab used by
    the kernel is a pure reshape (no transpose copy in the wrapper).
    """
    mu, rho = params["mu"], params["rho"]           # (IF, OF)
    sigma = jnp.log1p(jnp.exp(rho))                 # softplus
    in_f, out_f = mu.shape
    k_eps, k_r = jax.random.split(key)
    eps = jax.random.normal(k_eps, (in_f, vi_sample_n, out_f), jnp.float32)
    eps_norm = jnp.sqrt(jnp.sum(eps * eps, axis=(0, 2), keepdims=True))
    eps_hat = eps / eps_norm
    r = jax.random.normal(k_r, (1, vi_sample_n, 1), jnp.float32)
    return mu[:, None, :] + sigma[:, None, :] * eps_hat * r    # (IF, S, OF)


# ----------------------------------------------------------------------------
# Forward wrapper (pallas_call).
# ----------------------------------------------------------------------------
def fac_aff_forward(x, w_ifso, *, relu=False, block_n=256, block_c=512,
                    block_k=512, vmem_limit_bytes=48 * 1024 * 1024):
    """x: (N, IF) or (N, 1, IF); w_ifso: (IF, S, OF) samples -> (N, S, OF)."""
    if x.ndim == 3:
        # The module only creates a size-1 sample dim via unsqueeze.
        # TODO(synk): a per-sample (N, S, IF) input path is not implemented.
        assert x.shape[1] == 1, "only the broadcast (size-1) sample dim is supported"
        x = x[:, 0, :]
    N, IF = x.shape
    if_w, S, OF = w_ifso.shape
    assert if_w == IF
    SOF = S * OF

    # bf16 operands (MXU-native on v5e/v6e/v7x), f32 accumulation in-kernel.
    x = x.astype(jnp.bfloat16)
    w_slab = w_ifso.reshape(IF, SOF).astype(jnp.bfloat16)   # copy-free reshape

    # --- K (contraction) tiling: only activate for large in_features. -------
    if IF > 2 * block_k:
        tk = block_k                                  # multiple of 128
        if_pad = _round_up(IF, tk)
    else:
        tk = IF
        if_pad = IF
    k_blocks = if_pad // tk

    # --- lane tiling: pad S*OF to a 128 multiple; tile the slab if large. ---
    sof_128 = _round_up(SOF, _LANE)
    if sof_128 > block_c:
        tc = block_c                                  # multiple of 128
        sof_pad = _round_up(SOF, tc)
    else:
        tc = sof_128
        sof_pad = sof_128
    c_blocks = sof_pad // tc

    # --- batch tiling: largest multiple-of-16 tile that fits the VMEM budget.
    resident = (c_blocks == 1 and k_blocks == 1)      # weight slab stays put
    w_bufs = 1 if resident else 2
    w_bytes = 2 * tk * tc * w_bufs                    # bf16 weight block(s)
    budget = int(vmem_limit_bytes * 0.8)

    def _tile_bytes(t):
        b = w_bytes
        b += 2 * (2 * t * tk)                         # x tile, bf16, 2 buffers
        b += 2 * (4 * t * tc)                         # out tile, f32, 2 buffers
        if k_blocks > 1:
            b += 4 * t * tc                           # f32 accumulator scratch
        return b

    tn = _round_up(min(block_n, _round_up(N, _SUBLANE_BF16)), _SUBLANE_BF16)
    while tn > _SUBLANE_BF16 and _tile_bytes(tn) > budget:
        tn -= _SUBLANE_BF16
    n_pad = _round_up(N, tn)
    n_blocks = n_pad // tn

    # --- zero padding (zeros contribute nothing to the contraction). --------
    if n_pad != N or if_pad != IF:
        x = jnp.pad(x, ((0, n_pad - N), (0, if_pad - IF)))
    if if_pad != IF or sof_pad != SOF:
        w_slab = jnp.pad(w_slab, ((0, if_pad - IF), (0, sof_pad - SOF)))

    if k_blocks == 1:
        kern = functools.partial(_svi_affine_kernel_direct, relu=relu)
        scratch = []
    else:
        kern = functools.partial(_svi_affine_kernel_acc, relu=relu)
        scratch = [pltpu.VMEM((tn, tc), jnp.float32)]

    cost = pl.CostEstimate(
        flops=2 * n_pad * if_pad * sof_pad,
        transcendentals=0,
        bytes_accessed=(2 * n_pad * if_pad + 2 * if_pad * sof_pad
                        + 4 * n_pad * sof_pad),
    )

    def _build(single_buffer_weights):
        if single_buffer_weights:
            # Constant block index across the grid -> one VMEM copy suffices.
            w_spec = pl.BlockSpec((tk, tc), lambda i, c, k: (k, c),
                                  pipeline_mode=pl.Buffered(1))
        else:
            w_spec = pl.BlockSpec((tk, tc), lambda i, c, k: (k, c))
        return pl.pallas_call(
            kern,
            out_shape=jax.ShapeDtypeStruct((n_pad, sof_pad), jnp.float32),
            grid=(n_blocks, c_blocks, k_blocks),
            in_specs=[
                pl.BlockSpec((tn, tk), lambda i, c, k: (i, k)),
                w_spec,
            ],
            out_specs=pl.BlockSpec((tn, tc), lambda i, c, k: (i, c)),
            scratch_shapes=scratch,
            compiler_params=pltpu.CompilerParams(
                dimension_semantics=("parallel", "parallel", "arbitrary"),
                vmem_limit_bytes=vmem_limit_bytes),
            cost_estimate=cost,
        )

    if resident:
        try:
            out = _build(True)(x, w_slab)
        except Exception:
            # Graceful fallback if this Pallas build rejects Buffered(1);
            # identical semantics, just default double-buffering of the slab.
            out = _build(False)(x, w_slab)
    else:
        out = _build(False)(x, w_slab)

    # Back to the PyTorch convention (N, vi_sample_n, out_features).
    return out[:N, :SOF].reshape(N, S, OF)


# Pure-JAX reference (for correctness check only).
def _reference(x, w_ifso, *, relu=False):
    y = jnp.einsum("ni,iso->nso", x.astype(jnp.float32),
                   w_ifso.astype(jnp.float32))
    if relu:
        y = jnp.maximum(y, 0.0)
    return y


if __name__ == "__main__":
    # fac_aff(shape=(32, 64), relu=False, bias=False, std=1.0)
    shape = (32, 64)             # (in_features, out_features)
    N = 2
    vi_sample_n = 3

    key = jax.random.PRNGKey(0)
    k_param, k_sample, k_x = jax.random.split(key, 3)

    params = init_fac_aff_params(k_param, shape)
    w_ifso = sample_radial_weights(k_sample, params, vi_sample_n)
    x = jax.random.normal(k_x, (N, shape[0]), jnp.float32)

    y = fac_aff_forward(x, w_ifso, relu=False)
    y = jax.block_until_ready(y)
    assert y.shape == (N, vi_sample_n, shape[1]), y.shape

    # Oracle matching the kernel's arithmetic (bf16 operands, f32 accumulate).
    y_bf16_ref = _reference(x.astype(jnp.bfloat16).astype(jnp.float32),
                            w_ifso.astype(jnp.bfloat16).astype(jnp.float32))
    assert jnp.allclose(y, y_bf16_ref, atol=1e-3, rtol=1e-3), float(
        jnp.max(jnp.abs(y - y_bf16_ref)))

    # Loose check against the full-f32 math of the original module.
    y_f32_ref = _reference(x, w_ifso)
    assert jnp.allclose(y, y_f32_ref, atol=1e-1, rtol=1e-1), float(
        jnp.max(jnp.abs(y - y_f32_ref)))

    print("KERNEL_OK")
</pallas_src>

<mosaic_0001>
module attributes {stable_mosaic.version = 11 : i64} {
  func.func @_svi_affine_kernel_direct(%arg0: i32, %arg1: i32, %arg2: i32, %arg3: memref<16x32xbf16, #tpu.memory_space<vmem>>, %arg4: memref<32x256xbf16, #tpu.memory_space<vmem>>, %arg5: memref<16x256xf32, #tpu.memory_space<vmem>>) attributes {dimension_semantics = [#tpu.dimension_semantics<parallel>, #tpu.dimension_semantics<parallel>, #tpu.dimension_semantics<arbitrary>], iteration_bounds = array<i64: 1, 1, 1>, scalar_prefetch = 0 : i64, scratch_operands = 0 : i64, tpu.core_type = #tpu.core_type<tc>, window_params = [{transform_indices = @transform_0, window_bounds = array<i64: 16, 32>}, {pipeline_mode = #tpu.pipeline_mode<synchronous>, transform_indices = @transform_1, window_bounds = array<i64: 32, 256>}, {transform_indices = @transform_2, window_bounds = array<i64: 16, 256>}]} {
    %c0 = arith.constant 0 : index
    %c0_0 = arith.constant 0 : index
    %0 = vector.load %arg3[%c0, %c0_0] : memref<16x32xbf16, #tpu.memory_space<vmem>>, vector<16x32xbf16>
    %c0_1 = arith.constant 0 : index
    %c0_2 = arith.constant 0 : index
    %1 = vector.load %arg4[%c0_1, %c0_2] : memref<32x256xbf16, #tpu.memory_space<vmem>>, vector<32x256xbf16>
    %cst = arith.constant dense<0.000000e+00> : vector<16x256xf32>
    %2 = tpu.matmul %0, %1, %cst {dimension_numbers = #tpu.dot_dimension_numbers<[1], [0], [0], [1], [0, 0, 1, 1], [], []>} : vector<16x32xbf16>, vector<32x256xbf16>, vector<16x256xf32> -> vector<16x256xf32>
    %c0_3 = arith.constant 0 : index
    %c0_4 = arith.constant 0 : index
    %3 = vector.load %arg5[%c0_3, %c0_4] : memref<16x256xf32, #tpu.memory_space<vmem>>, vector<16x256xf32>
    tpu.vector_store %arg5[%c0_3, %c0_4], %2 {strides = array<i32>} : memref<16x256xf32, #tpu.memory_space<vmem>>, vector<16x256xf32>,
    return
  }
  func.func @transform_0(%arg0: i32, %arg1: i32, %arg2: i32) -> (i32, i32) {
    %c0_i32 = arith.constant 0 : i32
    return %arg0, %arg2 : i32, i32
  }
  func.func @transform_1(%arg0: i32, %arg1: i32, %arg2: i32) -> (i32, i32) {
    %c0_i32 = arith.constant 0 : i32
    return %arg2, %arg1 : i32, i32
  }
  func.func @transform_2(%arg0: i32, %arg1: i32, %arg2: i32) -> (i32, i32) {
    %c0_i32 = arith.constant 0 : i32
    return %arg0, %arg1 : i32, i32
  }
}

module attributes {stable_mosaic.version = 11 : i64} {
  func.func @_svi_affine_kernel_direct(%arg0: i32, %arg1: i32, %arg2: i32, %arg3: memref<16x32xbf16, #tpu.memory_space<vmem>>, %arg4: memref<32x256xbf16, #tpu.memory_space<vmem>>, %arg5: memref<16x256xf32, #tpu.memory_space<vmem>>) attributes {dimension_semantics = [#tpu.dimension_semantics<parallel>, #tpu.dimension_semantics<parallel>, #tpu.dimension_semantics<arbitrary>], iteration_bounds = array<i64: 1, 1, 1>, scalar_prefetch = 0 : i64, scratch_operands = 0 : i64, tpu.core_type = #tpu.core_type<tc>, window_params = [{transform_indices = @transform_0, window_bounds = array<i64: 16, 32>}, {transform_indices = @transform_1, window_bounds = array<i64: 32, 256>}, {transform_indices = @transform_2, window_bounds = array<i64: 16, 256>}]} {
    %c0 = arith.constant 0 : index
    %c0_0 = arith.constant 0 : index
    %0 = vector.load %arg3[%c0, %c0_0] : memref<16x32xbf16, #tpu.memory_space<vmem>>, vector<16x32xbf16>
    %c0_1 = arith.constant 0 : index
    %c0_2 = arith.constant 0 : index
    %1 = vector.load %arg4[%c0_1, %c0_2] : memref<32x256xbf16, #tpu.memory_space<vmem>>, vector<32x256xbf16>
    %cst = arith.constant dense<0.000000e+00> : vector<16x256xf32>
    %2 = tpu.matmul %0, %1, %cst {dimension_numbers = #tpu.dot_dimension_numbers<[1], [0], [0], [1], [0, 0, 1, 1], [], []>} : vector<16x32xbf16>, vector<32x256xbf16>, vector<16x256xf32> -> vector<16x256xf32>
    %c0_3 = arith.constant 0 : index
    %c0_4 = arith.constant 0 : index
    %3 = vector.load %arg5[%c0_3, %c0_4] : memref<16x256xf32, #tpu.memory_space<vmem>>, vector<16x256xf32>
    tpu.vector_store %arg5[%c0_3, %c0_4], %2 {strides = array<i32>} : memref<16x256xf32, #tpu.memory_space<vmem>>, vector<16x256xf32>,
    return
  }
  func.func @transform_0(%arg0: i32, %arg1: i32, %arg2: i32) -> (i32, i32) {
    %c0_i32 = arith.constant 0 : i32
    return %arg0, %arg2 : i32, i32
  }
  func.func @transform_1(%arg0: i32, %arg1: i32, %arg2: i32) -> (i32, i32) {
    %c0_i32 = arith.constant 0 : i32
    return %arg2, %arg1 : i32, i32
  }
  func.func @transform_2(%arg0: i32, %arg1: i32, %arg2: i32) -> (i32, i32) {
    %c0_i32 = arith.constant 0 : i32
    return %arg0, %arg1 : i32, i32
  }
}

</mosaic_0001>

<llo_original>
// kernel: tpu_custom_call.1
$region0: #{tpu_custom_call.1}
  #allocation0 [shape = 'u32[]', space=smem, size = 0x4, offset = 0x4, fixed_abs, tag = 'smem constant byte address 0x4 - core index']
  #allocation1 [shape = 'u32[144,128]{1,0:T(1,128)}', space=vmem, size = 0x12000, scoped, tag = 'internal scratch']
  %s0 = inlined_call_operand.hbm [shape: bf16[16,32], index: 0, kind: input, shape index: {}]
  %s1 = inlined_call_operand.hbm [shape: bf16[32,256], index: 1, kind: input, shape index: {}]
  %s2 = inlined_call_operand.hbm [shape: f32[16,256], index: 2, kind: output, shape index: {}]
  %s3 = sld [smem:[#allocation0]]
  $region26: #{tpu_custom_call.1} parent=0
    _
  %s5 = ssub.s32 1, %s3
  %s6 = scalar_select 0, %s5, %s3
  $region1: #{tpu_custom_call.1} parent=0
    #allocation2 [shape = 'u8[4096]{0}', space=vmem, size = 0x1000, scoped, tag = 'input window, operand 0, single buffered']
    #allocation3 [shape = 's32[1]{0}', space=sflag, size = 0x4, scoped, tag = 'scoped memory for tpu_custom_call.1']
    #allocation4 [shape = 's32[1]{0}', space=sflag, size = 0x4, scoped, tag = 'scoped memory for tpu_custom_call.1']
    #allocation5 [shape = 'u8[16384]{0}', space=vmem, size = 0x4000, scoped, tag = 'input window, operand 1, single buffered']
    #allocation6 [shape = 's32[1]{0}', space=sflag, size = 0x4, scoped, tag = 'scoped memory for tpu_custom_call.1']
    #allocation7 [shape = 'u8[16384]{0}', space=vmem, size = 0x4000, scoped, tag = 'output window, operand 0, single buffered']
    %7 = vsyncpa [#allocation3], 0
    %8 = vsyncpa [#allocation6], 0
    %9 = vsyncpa [#allocation4], 0
    // Predicated region
    $region2: #{tpu_custom_call.1} parent=1 // pred_check
      _
    $region3: #{tpu_custom_call.1} parent=1 // pred_check_branch
      %11 = sbr.rel (0) target = $region5
    $region4: #{tpu_custom_call.1} parent=1 // pred_region
      %s13 = ssub.s32 128, 128
      %14 = vsyncadd [#allocation3], %s13
      %s15 = sshll.u32 [#allocation2], 4
      %s16 = int_to_ptr.vmem [resolvable:$true] %s15
      %21 = dma.hbm_to_vmem [thread:$0]  %s0, 128, %s16, [#allocation3], 64, 64, 4
    $region5: #{tpu_custom_call.1} parent=1 // pred_fallthru
      _
    // Predicated region
    $region6: #{tpu_custom_call.1} parent=1 // pred_check
      _
    $region7: #{tpu_custom_call.1} parent=1 // pred_check_branch
      %23 = sbr.rel (0) target = $region9
    $region8: #{tpu_custom_call.1} parent=1 // pred_region
      %s25 = ssub.s32 512, 512
      %26 = vsyncadd [#allocation6], %s25
      %s27 = sshll.u32 [#allocation5], 4
      %s28 = int_to_ptr.vmem [resolvable:$true] %s27
      %33 = dma.hbm_to_vmem [thread:$0]  %s1, 512, %s28, [#allocation6], 128, 128, 8
    $region9: #{tpu_custom_call.1} parent=1 // pred_fallthru
      _
    // Predicated region
    $region10: #{tpu_custom_call.1} parent=1 // pred_check
      _
    $region11: #{tpu_custom_call.1} parent=1 // pred_check_branch
      %35 = sbr.rel (0) target = $region13
    $region12: #{tpu_custom_call.1} parent=1 // pred_region
      %36 = dma.done [#allocation3], 128
    $region13: #{tpu_custom_call.1} parent=1 // pred_fallthru
      _
    // Predicated region
    $region14: #{tpu_custom_call.1} parent=1 // pred_check
      _
    $region15: #{tpu_custom_call.1} parent=1 // pred_check_branch
      %38 = sbr.rel (0) target = $region17
    $region16: #{tpu_custom_call.1} parent=1 // pred_region
      %39 = dma.done [#allocation6], 512
    $region17: #{tpu_custom_call.1} parent=1 // pred_fallthru
      _
    %v41 = vld [vmem:[#allocation2] sm:$0xf]
    %v42 = vld [vmem:[#allocation2 + $0x4] sm:$0xf]
    %v43 = vld [vmem:[#allocation5] sm:$0xff]
    %v44 = vld [vmem:[#allocation5 + $0x8] sm:$0xff]
    %v45 = vld [vmem:[#allocation5 + $0x10] sm:$0xff]
    %v46 = vld [vmem:[#allocation5 + $0x18] sm:$0xff]
    %v49 = vunpack.c.l.b16 %v41
    %v50 = vunpack.c.l.b16 %v42
    %v51 = vpack.c.b16 %v50, %v49
    %v56 = vunpack.c.l.b16 %v43
    %v57 = vunpack.c.h.b16 %v43
    %v58 = vunpack.c.l.b16 %v44
    %v59 = vunpack.c.h.b16 %v44
    %v60 = vunpack.c.l.b16 %v45
    %v61 = vunpack.c.h.b16 %v45
    %v62 = vunpack.c.l.b16 %v46
    %v63 = vunpack.c.h.b16 %v46
    %v64 = vpack.c.b16 %v58, %v56
    %v65 = vpack.c.b16 %v59, %v57
    %v66 = vpack.c.b16 %v62, %v60
    %v67 = vpack.c.b16 %v63, %v61
    %vm72 = vcmask 261120
    %v74 = vsel %vm72, %v51, 0
    %76 = vmatprep.subr.bf16.mxu0 %v65
    %77 = vmatpush1.bf16.msra.mxu0 %v64
    %78 = vmatprep.subr.bf16.mxu0 %v67
    %79 = vmatpush1.bf16.msra.mxu0 %v66
    %80 = vmatprep.subr.bf16.mxu0 0
    %81 = vmatpush1.bf16.msra.mxu0 0
    %82 = vmatprep.subr.bf16.mxu0 0
    %83 = vmatpush1.bf16.msra.mxu0 0
    %84 = vmatprep.subr.bf16.mxu0 0
    %85 = vmatpush1.bf16.msra.mxu0 0
    %86 = vmatprep.subr.bf16.mxu0 0
    %87 = vmatpush1.bf16.msra.mxu0 0
    %88 = vmatprep.subr.bf16.mxu0 0
    %89 = vmatpush1.bf16.msra.mxu0 0
    %90 = vmatprep.subr.bf16.mxu0 0
    %91 = vmatpush1.bf16.msra.mxu0 0
    %92 = vmatprep.subr.bf16.mxu0 0
    %93 = vmatpush1.bf16.msra.mxu0 0
    %94 = vmatprep.subr.bf16.mxu0 0
    %95 = vmatpush1.bf16.msra.mxu0 0
    %96 = vmatprep.subr.bf16.mxu0 0
    %97 = vmatpush1.bf16.msra.mxu0 0
    %98 = vmatprep.subr.bf16.mxu0 0
    %99 = vmatpush1.bf16.msra.mxu0 0
    %100 = vmatprep.subr.bf16.mxu0 0
    %101 = vmatpush1.bf16.msra.mxu0 0
    %102 = vmatprep.subr.bf16.mxu0 0
    %103 = vmatpush1.bf16.msra.mxu0 0
    %104 = vmatprep.subr.bf16.mxu0 0
    %105 = vmatpush1.bf16.msra.mxu0 0
    %106 = vmatprep.subr.bf16.mxu0 0
    %107 = vmatpush1.bf16.msra.mxu0 0
    %108 = vmatprep.mubr.bf16.mxu0 0
    %109 = vmatmul.mubr.bf16.gmra.mrb[0].mxu0 %v74
    %v110 = vpop.f32.mrb[0].mxu0
    %v111 = vadd.f32 0.0, %v110
    %v112 = vpop.f32.mrb[0].mxu0
    %v113 = vadd.f32 0.0, %v112
    %v114 = vpop.f32.mrb[0].mxu0
    %v115 = vadd.f32 0.0, %v114
    %v116 = vpop.f32.mrb[0].mxu0
    %v117 = vadd.f32 0.0, %v116
    %118 = vdwg.mxu0
    %119 = vst [vmem:[#allocation7] sm:$0xff] %v111
    %120 = vst [vmem:[#allocation7 + $0x8] sm:$0xff] %v113
    %121 = vst [vmem:[#allocation7 + $0x10] sm:$0xff] %v115
    %122 = vst [vmem:[#allocation7 + $0x18] sm:$0xff] %v117
    // Predicated region
    $region18: #{tpu_custom_call.1} parent=1 // pred_check
      _
    $region19: #{tpu_custom_call.1} parent=1 // pred_check_branch
      %124 = sbr.rel (0) target = $region21
    $region20: #{tpu_custom_call.1} parent=1 // pred_region
      %s126 = ssub.s32 512, 512
      %127 = vsyncadd [#allocation4], %s126
      %s128 = sshll.u32 [#allocation7], 4
      %s129 = int_to_ptr.vmem [resolvable:$true] %s128
      %134 = dma.vmem_to_hbm [thread:$0]  %s129, 512, %s2, [#allocation4], 256, 256, 16
    $region21: #{tpu_custom_call.1} parent=1 // pred_fallthru
      _
    // Predicated region
    $region22: #{tpu_custom_call.1} parent=1 // pred_check
      _
    $region23: #{tpu_custom_call.1} parent=1 // pred_check_branch
      %136 = sbr.rel (0) target = $region25
    $region24: #{tpu_custom_call.1} parent=1 // pred_region
      %137 = dma.done [#allocation4], 512
    $region25: #{tpu_custom_call.1} parent=1 // pred_fallthru
      _
    %138 = vsyncpa [#allocation3], 1
    %139 = vsyncpa [#allocation6], 1
    %140 = vsyncpa [#allocation4], 1

// kernel: tpu_custom_call.1
$region0: #{tpu_custom_call.1}
  #allocation0 [shape = 'u32[]', space=smem, size = 0x4, offset = 0x4, fixed_abs, tag = 'smem constant byte address 0x4 - core index']
  #allocation1 [shape = 'u32[144,128]{1,0:T(1,128)}', space=vmem, size = 0x12000, scoped, tag = 'internal scratch']
  %s0 = inlined_call_operand.hbm [shape: bf16[16,32], index: 0, kind: input, shape index: {}]
  %s1 = inlined_call_operand.hbm [shape: bf16[32,256], index: 1, kind: input, shape index: {}]
  %s2 = inlined_call_operand.hbm [shape: f32[16,256], index: 2, kind: output, shape index: {}]
  %s3 = sld [smem:[#allocation0]]
  $region26: #{tpu_custom_call.1} parent=0
    _
  %s5 = ssub.s32 1, %s3
  %s6 = scalar_select 0, %s5, %s3
  $region1: #{tpu_custom_call.1} parent=0
    #allocation2 [shape = 'u8[4096]{0}', space=vmem, size = 0x1000, scoped, tag = 'input window, operand 0, single buffered']
    #allocation3 [shape = 's32[1]{0}', space=sflag, size = 0x4, scoped, tag = 'scoped memory for tpu_custom_call.1']
    #allocation4 [shape = 's32[1]{0}', space=sflag, size = 0x4, scoped, tag = 'scoped memory for tpu_custom_call.1']
    #allocation5 [shape = 'u8[16384]{0}', space=vmem, size = 0x4000, scoped, tag = 'input window, operand 1, single buffered']
    #allocation6 [shape = 's32[1]{0}', space=sflag, size = 0x4, scoped, tag = 'scoped memory for tpu_custom_call.1']
    #allocation7 [shape = 'u8[16384]{0}', space=vmem, size = 0x4000, scoped, tag = 'output window, operand 0, single buffered']
    %7 = vsyncpa [#allocation3], 0
    %8 = vsyncpa [#allocation6], 0
    %9 = vsyncpa [#allocation4], 0
    // Predicated region
    $region2: #{tpu_custom_call.1} parent=1 // pred_check
      _
    $region3: #{tpu_custom_call.1} parent=1 // pred_check_branch
      %11 = sbr.rel (0) target = $region5
    $region4: #{tpu_custom_call.1} parent=1 // pred_region
      %s13 = ssub.s32 128, 128
      %14 = vsyncadd [#allocation3], %s13
      %s15 = sshll.u32 [#allocation2], 4
      %s16 = int_to_ptr.vmem [resolvable:$true] %s15
      %21 = dma.hbm_to_vmem [thread:$0]  %s0, 128, %s16, [#allocation3], 64, 64, 4
    $region5: #{tpu_custom_call.1} parent=1 // pred_fallthru
      _
    // Predicated region
    $region6: #{tpu_custom_call.1} parent=1 // pred_check
      _
    $region7: #{tpu_custom_call.1} parent=1 // pred_check_branch
      %23 = sbr.rel (0) target = $region9
    $region8: #{tpu_custom_call.1} parent=1 // pred_region
      %s25 = ssub.s32 512, 512
      %26 = vsyncadd [#allocation6], %s25
      %s27 = sshll.u32 [#allocation5], 4
      %s28 = int_to_ptr.vmem [resolvable:$true] %s27
      %33 = dma.hbm_to_vmem [thread:$0]  %s1, 512, %s28, [#allocation6], 128, 128, 8
    $region9: #{tpu_custom_call.1} parent=1 // pred_fallthru
      _
    // Predicated region
    $region10: #{tpu_custom_call.1} parent=1 // pred_check
      _
    $region11: #{tpu_custom_call.1} parent=1 // pred_check_branch
      %35 = sbr.rel (0) target = $region13
    $region12: #{tpu_custom_call.1} parent=1 // pred_region
      %36 = dma.done [#allocation3], 128
    $region13: #{tpu_custom_call.1} parent=1 // pred_fallthru
      _
    // Predicated region
    $region14: #{tpu_custom_call.1} parent=1 // pred_check
      _
    $region15: #{tpu_custom_call.1} parent=1 // pred_check_branch
      %38 = sbr.rel (0) target = $region17
    $region16: #{tpu_custom_call.1} parent=1 // pred_region
      %39 = dma.done [#allocation6], 512
    $region17: #{tpu_custom_call.1} parent=1 // pred_fallthru
      _
    %v41 = vld [vmem:[#allocation2] sm:$0xf]
    %v42 = vld [vmem:[#allocation2 + $0x4] sm:$0xf]
    %v43 = vld [vmem:[#allocation5] sm:$0xff]
    %v44 = vld [vmem:[#allocation5 + $0x8] sm:$0xff]
    %v45 = vld [vmem:[#allocation5 + $0x10] sm:$0xff]
    %v46 = vld [vmem:[#allocation5 + $0x18] sm:$0xff]
    %v49 = vunpack.c.l.b16 %v41
    %v50 = vunpack.c.l.b16 %v42
    %v51 = vpack.c.b16 %v50, %v49
    %v56 = vunpack.c.l.b16 %v43
    %v57 = vunpack.c.h.b16 %v43
    %v58 = vunpack.c.l.b16 %v44
    %v59 = vunpack.c.h.b16 %v44
    %v60 = vunpack.c.l.b16 %v45
    %v61 = vunpack.c.h.b16 %v45
    %v62 = vunpack.c.l.b16 %v46
    %v63 = vunpack.c.h.b16 %v46
    %v64 = vpack.c.b16 %v58, %v56
    %v65 = vpack.c.b16 %v59, %v57
    %v66 = vpack.c.b16 %v62, %v60
    %v67 = vpack.c.b16 %v63, %v61
    %vm72 = vcmask 261120
    %v74 = vsel %vm72, %v51, 0
    %76 = vmatprep.subr.bf16.mxu0 %v65
    %77 = vmatpush1.bf16.msra.mxu0 %v64
    %78 = vmatprep.subr.bf16.mxu0 %v67
    %79 = vmatpush1.bf16.msra.mxu0 %v66
    %80 = vmatprep.subr.bf16.mxu0 0
    %81 = vmatpush1.bf16.msra.mxu0 0
    %82 = vmatprep.subr.bf16.mxu0 0
    %83 = vmatpush1.bf16.msra.mxu0 0
    %84 = vmatprep.subr.bf16.mxu0 0
    %85 = vmatpush1.bf16.msra.mxu0 0
    %86 = vmatprep.subr.bf16.mxu0 0
    %87 = vmatpush1.bf16.msra.mxu0 0
    %88 = vmatprep.subr.bf16.mxu0 0
    %89 = vmatpush1.bf16.msra.mxu0 0
    %90 = vmatprep.subr.bf16.mxu0 0
    %91 = vmatpush1.bf16.msra.mxu0 0
    %92 = vmatprep.subr.bf16.mxu0 0
    %93 = vmatpush1.bf16.msra.mxu0 0
    %94 = vmatprep.subr.bf16.mxu0 0
    %95 = vmatpush1.bf16.msra.mxu0 0
    %96 = vmatprep.subr.bf16.mxu0 0
    %97 = vmatpush1.bf16.msra.mxu0 0
    %98 = vmatprep.subr.bf16.mxu0 0
    %99 = vmatpush1.bf16.msra.mxu0 0
    %100 = vmatprep.subr.bf16.mxu0 0
    %101 = vmatpush1.bf16.msra.mxu0 0
    %102 = vmatprep.subr.bf16.mxu0 0
    %103 = vmatpush1.bf16.msra.mxu0 0
    %104 = vmatprep.subr.bf16.mxu0 0
    %105 = vmatpush1.bf16.msra.mxu0 0
    %106 = vmatprep.subr.bf16.mxu0 0
    %107 = vmatpush1.bf16.msra.mxu0 0
    %108 = vmatprep.mubr.bf16.mxu0 0
    %109 = vmatmul.mubr.bf16.gmra.mrb[0].mxu0 %v74
    %v110 = vpop.f32.mrb[0].mxu0
    %v111 = vadd.f32 0.0, %v110
    %v112 = vpop.f32.mrb[0].mxu0
    %v113 = vadd.f32 0.0, %v112
    %v114 = vpop.f32.mrb[0].mxu0
    %v115 = vadd.f32 0.0, %v114
    %v116 = vpop.f32.mrb[0].mxu0
    %v117 = vadd.f32 0.0, %v116
    %118 = vdwg.mxu0
    %119 = vst [vmem:[#allocation7] sm:$0xff] %v111
    %120 = vst [vmem:[#allocation7 + $0x8] sm:$0xff] %v113
    %121 = vst [vmem:[#allocation7 + $0x10] sm:$0xff] %v115
    %122 = vst [vmem:[#allocation7 + $0x18] sm:$0xff] %v117
    // Predicated region
    $region18: #{tpu_custom_call.1} parent=1 // pred_check
      _
    $region19: #{tpu_custom_call.1} parent=1 // pred_check_branch
      %124 = sbr.rel (0) target = $region21
    $region20: #{tpu_custom_call.1} parent=1 // pred_region
      %s126 = ssub.s32 512, 512
      %127 = vsyncadd [#allocation4], %s126
      %s128 = sshll.u32 [#allocation7], 4
      %s129 = int_to_ptr.vmem [resolvable:$true] %s128
      %134 = dma.vmem_to_hbm [thread:$0]  %s129, 512, %s2, [#allocation4], 256, 256, 16
    $region21: #{tpu_custom_call.1} parent=1 // pred_fallthru
      _
    // Predicated region
    $region22: #{tpu_custom_call.1} parent=1 // pred_check
      _
    $region23: #{tpu_custom_call.1} parent=1 // pred_check_branch
      %136 = sbr.rel (0) target = $region25
    $region24: #{tpu_custom_call.1} parent=1 // pred_region
      %137 = dma.done [#allocation4], 512
    $region25: #{tpu_custom_call.1} parent=1 // pred_fallthru
      _
    %138 = vsyncpa [#allocation3], 1
    %139 = vsyncpa [#allocation6], 1
    %140 = vsyncpa [#allocation4], 1

</llo_original>
